<compile_context>
chip_gen: v7x
topology: tpu7x:2x2x1
jax: 0.10.0
libtpu: 0.0.40
codegen_flags: <defaults>
</compile_context>

<pallas_src>
import functools

import jax
import jax.numpy as jnp
from jax.experimental import pallas as pl
from jax.experimental.pallas import tpu as pltpu


def _round_up(x: int, m: int) -> int:
    return (x + m - 1) // m * m


# ----------------------------------------------------------------------------
# One-time parameter preparation (hoisted out of the per-call forward).
#   * weights cast to compute dtype (bf16 by default), kept at true shapes
#   * biases cast to f32, reshaped to (1, N) for broadcast
#   * ONLY the final layer's weight/bias lane dim is zero-padded to a multiple
#     of 128 so the output store is lane-dense (padded columns stay exactly 0).
# ----------------------------------------------------------------------------
def prepare_params(params, compute_dtype=jnp.bfloat16):
    prepared = []
    n_layers = len(params)
    for i, (w, b) in enumerate(params):
        fan_in, fan_out = w.shape
        w_c = jnp.asarray(w, compute_dtype)
        b_c = jnp.asarray(b, jnp.float32).reshape(1, fan_out)
        if i == n_layers - 1:
            n_pad = _round_up(fan_out, 128)
            w_c = jnp.pad(w_c, ((0, 0), (0, n_pad - fan_out)))
            b_c = jnp.pad(b_c, ((0, 0), (0, n_pad - fan_out)))
        prepared.append((jax.block_until_ready(w_c), jax.block_until_ready(b_c)))
    return prepared


# ----------------------------------------------------------------------------
# Fused MLP kernel: x -> [Linear+ReLU]*(L-1) -> Linear, all inside one kernel.
# refs = (x_ref, w0_ref, b0_ref, ..., o_ref).  Activations stay as values
# (vregs / compiler-managed VMEM) between layers; the only HBM traffic is the
# input/param DMA and the lane-dense final output store.
# ----------------------------------------------------------------------------
def _fused_mlp_kernel(*refs, n_layers: int):
    x_ref = refs[0]
    o_ref = refs[1 + 2 * n_layers]

    h = x_ref[...]                                  # (bm, K0) compute dtype
    for i in range(n_layers):
        w = refs[1 + 2 * i][...]                    # (K, N) compute dtype (true N)
        b = refs[2 + 2 * i][...]                    # (1, N) float32
        acc = jnp.dot(h, w, preferred_element_type=jnp.float32) + b   # f32 accum
        if i < n_layers - 1:
            h = jnp.maximum(acc, 0.0).astype(w.dtype)    # ReLU, back to compute dtype
        else:
            h = acc                                       # final layer stays f32
    o_ref[...] = h.astype(o_ref.dtype)
    # TODO(synk): BatchNorm1d / Dropout branches of FlexibleNN are disabled by
    # default (use_batch_norm=False, dropout_rate=0.0) and are not implemented.


def flexible_nn_forward(x, prepared, *, output_size):
    """Forward pass of FlexibleNN (dropout=0, no batchnorm) via one Pallas kernel.

    x: (B, C, H, W) float32 (NCHW, flattened row-major like nn.Flatten(start_dim=1))
    prepared: output of prepare_params() (weights already cast, last layer padded)
    output_size: true (unpadded) output width; static under jit.
    """
    compute_dtype = prepared[0][0].dtype
    B = x.shape[0]
    h = x.reshape(B, -1).astype(compute_dtype)
    K0 = h.shape[1]
    n_layers = len(prepared)
    out_pad = prepared[-1][0].shape[1]              # lane-dense (multiple of 128)

    # Batch block: sublane-aligned (8 rows f32 / 16 rows bf16), capped at 256.
    sublane = 16 if compute_dtype == jnp.bfloat16 else 8
    bm = min(_round_up(B, sublane), 256)
    B_pad = _round_up(B, bm)
    grid = (B_pad // bm,)

    # Only row padding on the input (tiny); no lane padding needed anywhere.
    h_p = jnp.pad(h, ((0, B_pad - B), (0, 0)))

    flat_inputs = [h_p]
    in_specs = [pl.BlockSpec((bm, K0), lambda i: (i, 0))]
    for (w, b) in prepared:
        flat_inputs.extend((w, b))
        # Full-array blocks; constant index_map => fetched once, not per grid step.
        in_specs.append(pl.BlockSpec(w.shape, lambda i: (0, 0)))
        in_specs.append(pl.BlockSpec(b.shape, lambda i: (0, 0)))
    out_spec = pl.BlockSpec((bm, out_pad), lambda i: (i, 0))

    # Scheduling / scoped-VMEM hygiene.
    flops = sum(2 * B_pad * w.shape[0] * w.shape[1] for (w, _) in prepared)
    in_bytes = sum(int(v.size) * v.dtype.itemsize for v in flat_inputs)
    out_bytes = B_pad * out_pad * 4
    block_bytes = (bm * K0 * jnp.dtype(compute_dtype).itemsize
                   + sum(int(w.size) * w.dtype.itemsize
                         + int(b.size) * b.dtype.itemsize for (w, b) in prepared)
                   + bm * out_pad * 4)
    vmem_limit = min(max(2 * block_bytes + (1 << 20), 32 << 20), 128 << 20)

    out_padded = pl.pallas_call(
        functools.partial(_fused_mlp_kernel, n_layers=n_layers),
        out_shape=jax.ShapeDtypeStruct((B_pad, out_pad), jnp.float32),
        grid=grid,
        in_specs=in_specs,
        out_specs=out_spec,
        compiler_params=pltpu.CompilerParams(
            dimension_semantics=("parallel",),      # lets v7x's 2nd TC join when grid > 1
            vmem_limit_bytes=vmem_limit),
        cost_estimate=pl.CostEstimate(
            flops=int(flops), transcendentals=0,
            bytes_accessed=int(in_bytes + out_bytes)),
    )(*flat_inputs)

    # Strip batch-row and output-lane padding.
    return out_padded[:B, :output_size].astype(x.dtype)


# ----------------------------------------------------------------------------
# Parameter init mirroring nn.Linear shapes (weights stored as torch weight.T).
# ----------------------------------------------------------------------------
def init_flexible_nn_params(key, input_size, hidden_sizes, output_size):
    params = []
    sizes = [input_size] + list(hidden_sizes) + [output_size]
    for fan_in, fan_out in zip(sizes[:-1], sizes[1:]):
        key, kw, kb = jax.random.split(key, 3)
        bound = 1.0 / (fan_in ** 0.5)  # torch nn.Linear default uniform bound
        w = jax.random.uniform(kw, (fan_in, fan_out), jnp.float32, -bound, bound)
        b = jax.random.uniform(kb, (fan_out,), jnp.float32, -bound, bound)
        params.append((w, b))
    return params


# ----------------------------------------------------------------------------
# Pure-JAX reference for sanity checking.
# ----------------------------------------------------------------------------
def flexible_nn_ref(x, params):
    h = x.reshape(x.shape[0], -1)
    for i, (w, b) in enumerate(params):
        h = h @ w + b
        if i < len(params) - 1:
            h = jnp.maximum(h, 0.0)
    return h


if __name__ == "__main__":
    key = jax.random.PRNGKey(0)

    # Small, module-consistent shapes: image-like (B, C, H, W) flattened to C*H*W.
    B, C, H, W = 2, 4, 16, 16
    input_size = C * H * W          # 1024
    hidden_sizes = [32, 32]
    output_size = 10

    key, kx, kp = jax.random.split(key, 3)
    x = jax.random.normal(kx, (B, C, H, W), dtype=jnp.float32)
    params = init_flexible_nn_params(kp, input_size, hidden_sizes, output_size)

    ref = flexible_nn_ref(x, params)

    fwd = jax.jit(flexible_nn_forward, static_argnames=("output_size",))

    # f32 path (exact vs. reference).
    prep_f32 = prepare_params(params, jnp.float32)
    out_f32 = jax.block_until_ready(fwd(x, prep_f32, output_size=output_size))
    assert out_f32.shape == (B, output_size), out_f32.shape
    assert jnp.allclose(out_f32, ref, atol=1e-4, rtol=1e-4), "f32 mismatch vs reference"

    # bf16 default path (weights + activations bf16, f32 accumulation).
    prep_bf16 = prepare_params(params)   # bf16 is the default on all generations
    out_bf16 = jax.block_until_ready(fwd(x, prep_bf16, output_size=output_size))
    assert out_bf16.shape == (B, output_size), out_bf16.shape
    assert jnp.allclose(out_bf16, ref, atol=2e-2, rtol=2e-2), "bf16 mismatch vs reference"

    print("KERNEL_OK")
</pallas_src>

<mosaic_0001>
module attributes {stable_mosaic.version = 11 : i64} {
  func.func @_fused_mlp_kernel(%arg0: i32, %arg1: memref<8x1024xf32, #tpu.memory_space<vmem>>, %arg2: memref<1024x32xf32, #tpu.memory_space<vmem>>, %arg3: memref<1x32xf32, #tpu.memory_space<vmem>>, %arg4: memref<32x32xf32, #tpu.memory_space<vmem>>, %arg5: memref<1x32xf32, #tpu.memory_space<vmem>>, %arg6: memref<32x128xf32, #tpu.memory_space<vmem>>, %arg7: memref<1x128xf32, #tpu.memory_space<vmem>>, %arg8: memref<8x128xf32, #tpu.memory_space<vmem>>) attributes {dimension_semantics = [#tpu.dimension_semantics<parallel>], iteration_bounds = array<i64: 1>, scalar_prefetch = 0 : i64, scratch_operands = 0 : i64, tpu.core_type = #tpu.core_type<tc>, window_params = [{transform_indices = @transform_0, window_bounds = array<i64: 8, 1024>}, {pipeline_mode = #tpu.pipeline_mode<synchronous>, transform_indices = @transform_1, window_bounds = array<i64: 1024, 32>}, {pipeline_mode = #tpu.pipeline_mode<synchronous>, transform_indices = @transform_2, window_bounds = array<i64: 1, 32>}, {pipeline_mode = #tpu.pipeline_mode<synchronous>, transform_indices = @transform_3, window_bounds = array<i64: 32, 32>}, {pipeline_mode = #tpu.pipeline_mode<synchronous>, transform_indices = @transform_4, window_bounds = array<i64: 1, 32>}, {pipeline_mode = #tpu.pipeline_mode<synchronous>, transform_indices = @transform_5, window_bounds = array<i64: 32, 128>}, {pipeline_mode = #tpu.pipeline_mode<synchronous>, transform_indices = @transform_6, window_bounds = array<i64: 1, 128>}, {transform_indices = @transform_7, window_bounds = array<i64: 8, 128>}]} {
    %c0 = arith.constant 0 : index
    %c0_0 = arith.constant 0 : index
    %0 = vector.load %arg1[%c0, %c0_0] : memref<8x1024xf32, #tpu.memory_space<vmem>>, vector<8x1024xf32>
    %c0_1 = arith.constant 0 : index
    %c0_2 = arith.constant 0 : index
    %1 = vector.load %arg2[%c0_1, %c0_2] : memref<1024x32xf32, #tpu.memory_space<vmem>>, vector<1024x32xf32>
    %c0_3 = arith.constant 0 : index
    %c0_4 = arith.constant 0 : index
    %2 = vector.load %arg3[%c0_3, %c0_4] : memref<1x32xf32, #tpu.memory_space<vmem>>, vector<1x32xf32>
    %cst = arith.constant dense<0.000000e+00> : vector<8x32xf32>
    %3 = tpu.matmul %0, %1, %cst {dimension_numbers = #tpu.dot_dimension_numbers<[1], [0], [0], [1], [0, 0, 1, 1], [], []>} : vector<8x1024xf32>, vector<1024x32xf32>, vector<8x32xf32> -> vector<8x32xf32>
    %4 = vector.broadcast %2 : vector<1x32xf32> to vector<8x32xf32>
    %5 = arith.addf %3, %4 : vector<8x32xf32>
    %cst_5 = arith.constant 0.000000e+00 : f32
    %6 = vector.broadcast %cst_5 : f32 to vector<8x32xf32>
    %7 = arith.maximumf %5, %6 : vector<8x32xf32>
    %c0_6 = arith.constant 0 : index
    %c0_7 = arith.constant 0 : index
    %8 = vector.load %arg4[%c0_6, %c0_7] : memref<32x32xf32, #tpu.memory_space<vmem>>, vector<32x32xf32>
    %c0_8 = arith.constant 0 : index
    %c0_9 = arith.constant 0 : index
    %9 = vector.load %arg5[%c0_8, %c0_9] : memref<1x32xf32, #tpu.memory_space<vmem>>, vector<1x32xf32>
    %cst_10 = arith.constant dense<0.000000e+00> : vector<8x32xf32>
    %10 = tpu.matmul %7, %8, %cst_10 {dimension_numbers = #tpu.dot_dimension_numbers<[1], [0], [0], [1], [0, 0, 1, 1], [], []>} : vector<8x32xf32>, vector<32x32xf32>, vector<8x32xf32> -> vector<8x32xf32>
    %11 = vector.broadcast %9 : vector<1x32xf32> to vector<8x32xf32>
    %12 = arith.addf %10, %11 : vector<8x32xf32>
    %cst_11 = arith.constant 0.000000e+00 : f32
    %13 = vector.broadcast %cst_11 : f32 to vector<8x32xf32>
    %14 = arith.maximumf %12, %13 : vector<8x32xf32>
    %c0_12 = arith.constant 0 : index
    %c0_13 = arith.constant 0 : index
    %15 = vector.load %arg6[%c0_12, %c0_13] : memref<32x128xf32, #tpu.memory_space<vmem>>, vector<32x128xf32>
    %c0_14 = arith.constant 0 : index
    %c0_15 = arith.constant 0 : index
    %16 = vector.load %arg7[%c0_14, %c0_15] : memref<1x128xf32, #tpu.memory_space<vmem>>, vector<1x128xf32>
    %cst_16 = arith.constant dense<0.000000e+00> : vector<8x128xf32>
    %17 = tpu.matmul %14, %15, %cst_16 {dimension_numbers = #tpu.dot_dimension_numbers<[1], [0], [0], [1], [0, 0, 1, 1], [], []>} : vector<8x32xf32>, vector<32x128xf32>, vector<8x128xf32> -> vector<8x128xf32>
    %18 = vector.broadcast %16 : vector<1x128xf32> to vector<8x128xf32>
    %19 = arith.addf %17, %18 : vector<8x128xf32>
    %c0_17 = arith.constant 0 : index
    %c0_18 = arith.constant 0 : index
    %20 = vector.load %arg8[%c0_17, %c0_18] : memref<8x128xf32, #tpu.memory_space<vmem>>, vector<8x128xf32>
    tpu.vector_store %arg8[%c0_17, %c0_18], %19 {strides = array<i32>} : memref<8x128xf32, #tpu.memory_space<vmem>>, vector<8x128xf32>,
    return
  }
  func.func @transform_0(%arg0: i32) -> (i32, i32) {
    %c0_i32 = arith.constant 0 : i32
    %c0_i32_0 = arith.constant 0 : i32
    return %arg0, %c0_i32 : i32, i32
  }
  func.func @transform_1(%arg0: i32) -> (i32, i32) {
    %c0_i32 = arith.constant 0 : i32
    %c0_i32_0 = arith.constant 0 : i32
    %c0_i32_1 = arith.constant 0 : i32
    return %c0_i32, %c0_i32_0 : i32, i32
  }
  func.func @transform_2(%arg0: i32) -> (i32, i32) {
    %c0_i32 = arith.constant 0 : i32
    %c0_i32_0 = arith.constant 0 : i32
    %c0_i32_1 = arith.constant 0 : i32
    return %c0_i32, %c0_i32_0 : i32, i32
  }
  func.func @transform_3(%arg0: i32) -> (i32, i32) {
    %c0_i32 = arith.constant 0 : i32
    %c0_i32_0 = arith.constant 0 : i32
    %c0_i32_1 = arith.constant 0 : i32
    return %c0_i32, %c0_i32_0 : i32, i32
  }
  func.func @transform_4(%arg0: i32) -> (i32, i32) {
    %c0_i32 = arith.constant 0 : i32
    %c0_i32_0 = arith.constant 0 : i32
    %c0_i32_1 = arith.constant 0 : i32
    return %c0_i32, %c0_i32_0 : i32, i32
  }
  func.func @transform_5(%arg0: i32) -> (i32, i32) {
    %c0_i32 = arith.constant 0 : i32
    %c0_i32_0 = arith.constant 0 : i32
    %c0_i32_1 = arith.constant 0 : i32
    return %c0_i32, %c0_i32_0 : i32, i32
  }
  func.func @transform_6(%arg0: i32) -> (i32, i32) {
    %c0_i32 = arith.constant 0 : i32
    %c0_i32_0 = arith.constant 0 : i32
    %c0_i32_1 = arith.constant 0 : i32
    return %c0_i32, %c0_i32_0 : i32, i32
  }
  func.func @transform_7(%arg0: i32) -> (i32, i32) {
    %c0_i32 = arith.constant 0 : i32
    %c0_i32_0 = arith.constant 0 : i32
    return %arg0, %c0_i32 : i32, i32
  }
}

</mosaic_0001>

<llo_original>
// kernel: flexible_nn_forward.1
$region0: #{flexible_nn_forward.1}
  #allocation0 [shape = 'u32[]', space=smem, size = 0x4, offset = 0x4, fixed_abs, tag = 'smem constant byte address 0x4 - core index']
  #allocation1 [shape = 'u32[144,128]{1,0:T(1,128)}', space=vmem, size = 0x12000, scoped, tag = 'internal scratch']
  %s0 = inlined_call_operand.vmem [shape: f32[8,1024], index: 0, kind: input, shape index: {}]
  %s1 = inlined_call_operand.vmem [shape: f32[1024,32], index: 1, kind: input, shape index: {}]
  %s2 = inlined_call_operand.vmem [shape: f32[1,32], index: 2, kind: input, shape index: {}]
  %s3 = inlined_call_operand.vmem [shape: f32[32,32], index: 3, kind: input, shape index: {}]
  %s4 = inlined_call_operand.vmem [shape: f32[1,32], index: 4, kind: input, shape index: {}]
  %s5 = inlined_call_operand.vmem [shape: f32[32,128], index: 5, kind: input, shape index: {}]
  %s6 = inlined_call_operand.vmem [shape: f32[1,128], index: 6, kind: input, shape index: {}]
  %s7 = inlined_call_operand.vmem [shape: f32[8,128], index: 7, kind: output, shape index: {}]
  %s8 = sld [smem:[#allocation0]]
  $region38: #{flexible_nn_forward.1} parent=0
    _
  %s10 = ssub.s32 1, %s8
  %s11 = scalar_select 0, %s10, %s8
  // Predicated region
  $region2: #{flexible_nn_forward.1} parent=0 // pred_check
    _
  $region3: #{flexible_nn_forward.1} parent=0 // pred_check_branch
    %13 = sbr.rel (0) target = $region5
  $region4: #{flexible_nn_forward.1} parent=0 // pred_region
    _
  $region5: #{flexible_nn_forward.1} parent=0 // pred_fallthru
    _
  // Predicated region
  $region6: #{flexible_nn_forward.1} parent=0 // pred_check
    _
  $region7: #{flexible_nn_forward.1} parent=0 // pred_check_branch
    %15 = sbr.rel (0) target = $region9
  $region8: #{flexible_nn_forward.1} parent=0 // pred_region
    _
  $region9: #{flexible_nn_forward.1} parent=0 // pred_fallthru
    _
  // Predicated region
  $region10: #{flexible_nn_forward.1} parent=0 // pred_check
    _
  $region11: #{flexible_nn_forward.1} parent=0 // pred_check_branch
    %17 = sbr.rel (0) target = $region13
  $region12: #{flexible_nn_forward.1} parent=0 // pred_region
    _
  $region13: #{flexible_nn_forward.1} parent=0 // pred_fallthru
    _
  // Predicated region
  $region14: #{flexible_nn_forward.1} parent=0 // pred_check
    _
  $region15: #{flexible_nn_forward.1} parent=0 // pred_check_branch
    %19 = sbr.rel (0) target = $region17
  $region16: #{flexible_nn_forward.1} parent=0 // pred_region
    _
  $region17: #{flexible_nn_forward.1} parent=0 // pred_fallthru
    _
  // Predicated region
  $region18: #{flexible_nn_forward.1} parent=0 // pred_check
    _
  $region19: #{flexible_nn_forward.1} parent=0 // pred_check_branch
    %21 = sbr.rel (0) target = $region21
  $region20: #{flexible_nn_forward.1} parent=0 // pred_region
    _
  $region21: #{flexible_nn_forward.1} parent=0 // pred_fallthru
    _
  // Predicated region
  $region22: #{flexible_nn_forward.1} parent=0 // pred_check
    _
  $region23: #{flexible_nn_forward.1} parent=0 // pred_check_branch
    %23 = sbr.rel (0) target = $region25
  $region24: #{flexible_nn_forward.1} parent=0 // pred_region
    _
  $region25: #{flexible_nn_forward.1} parent=0 // pred_fallthru
    _
  // Predicated region
  $region26: #{flexible_nn_forward.1} parent=0 // pred_check
    _
  $region27: #{flexible_nn_forward.1} parent=0 // pred_check_branch
    %25 = sbr.rel (0) target = $region29
  $region28: #{flexible_nn_forward.1} parent=0 // pred_region
    _
  $region29: #{flexible_nn_forward.1} parent=0 // pred_fallthru
    _
  %v26 = vld [vmem:[%s0] sm:$0xff]
  %v27 = vld [vmem:[%s0 + $0x8] sm:$0xff]
  %v28 = vld [vmem:[%s0 + $0x10] sm:$0xff]
  %v29 = vld [vmem:[%s0 + $0x18] sm:$0xff]
  %v30 = vld [vmem:[%s0 + $0x20] sm:$0xff]
  %v31 = vld [vmem:[%s0 + $0x28] sm:$0xff]
  %v32 = vld [vmem:[%s0 + $0x30] sm:$0xff]
  %v33 = vld [vmem:[%s0 + $0x38] sm:$0xff]
  %v34 = vld [vmem:[%s1] sm:$0xff]
  %v35 = vld [vmem:[%s1 + $0x8] sm:$0xff]
  %v36 = vld [vmem:[%s1 + $0x10] sm:$0xff]
  %v37 = vld [vmem:[%s1 + $0x18] sm:$0xff]
  %v38 = vld [vmem:[%s1 + $0x20] sm:$0xff]
  %v39 = vld [vmem:[%s1 + $0x28] sm:$0xff]
  %v40 = vld [vmem:[%s1 + $0x30] sm:$0xff]
  %v41 = vld [vmem:[%s1 + $0x38] sm:$0xff]
  %v42 = vld [vmem:[%s1 + $0x40] sm:$0xff]
  %v43 = vld [vmem:[%s1 + $0x48] sm:$0xff]
  %v44 = vld [vmem:[%s1 + $0x50] sm:$0xff]
  %v45 = vld [vmem:[%s1 + $0x58] sm:$0xff]
  %v46 = vld [vmem:[%s1 + $0x60] sm:$0xff]
  %v47 = vld [vmem:[%s1 + $0x68] sm:$0xff]
  %v48 = vld [vmem:[%s1 + $0x70] sm:$0xff]
  %v49 = vld [vmem:[%s1 + $0x78] sm:$0xff]
  %v50 = vld [vmem:[%s1 + $0x80] sm:$0xff]
  %v51 = vld [vmem:[%s1 + $0x88] sm:$0xff]
  %v52 = vld [vmem:[%s1 + $0x90] sm:$0xff]
  %v53 = vld [vmem:[%s1 + $0x98] sm:$0xff]
  %v54 = vld [vmem:[%s1 + $0xa0] sm:$0xff]
  %v55 = vld [vmem:[%s1 + $0xa8] sm:$0xff]
  %v56 = vld [vmem:[%s1 + $0xb0] sm:$0xff]
  %v57 = vld [vmem:[%s1 + $0xb8] sm:$0xff]
  %v58 = vld [vmem:[%s1 + $0xc0] sm:$0xff]
  %v59 = vld [vmem:[%s1 + $0xc8] sm:$0xff]
  %v60 = vld [vmem:[%s1 + $0xd0] sm:$0xff]
  %v61 = vld [vmem:[%s1 + $0xd8] sm:$0xff]
  %v62 = vld [vmem:[%s1 + $0xe0] sm:$0xff]
  %v63 = vld [vmem:[%s1 + $0xe8] sm:$0xff]
  %v64 = vld [vmem:[%s1 + $0xf0] sm:$0xff]
  %v65 = vld [vmem:[%s1 + $0xf8] sm:$0xff]
  %v66 = vld [vmem:[%s1 + $0x100] sm:$0xff]
  %v67 = vld [vmem:[%s1 + $0x108] sm:$0xff]
  %v68 = vld [vmem:[%s1 + $0x110] sm:$0xff]
  %v69 = vld [vmem:[%s1 + $0x118] sm:$0xff]
  %v70 = vld [vmem:[%s1 + $0x120] sm:$0xff]
  %v71 = vld [vmem:[%s1 + $0x128] sm:$0xff]
  %v72 = vld [vmem:[%s1 + $0x130] sm:$0xff]
  %v73 = vld [vmem:[%s1 + $0x138] sm:$0xff]
  %v74 = vld [vmem:[%s1 + $0x140] sm:$0xff]
  %v75 = vld [vmem:[%s1 + $0x148] sm:$0xff]
  %v76 = vld [vmem:[%s1 + $0x150] sm:$0xff]
  %v77 = vld [vmem:[%s1 + $0x158] sm:$0xff]
  %v78 = vld [vmem:[%s1 + $0x160] sm:$0xff]
  %v79 = vld [vmem:[%s1 + $0x168] sm:$0xff]
  %v80 = vld [vmem:[%s1 + $0x170] sm:$0xff]
  %v81 = vld [vmem:[%s1 + $0x178] sm:$0xff]
  %v82 = vld [vmem:[%s1 + $0x180] sm:$0xff]
  %v83 = vld [vmem:[%s1 + $0x188] sm:$0xff]
  %v84 = vld [vmem:[%s1 + $0x190] sm:$0xff]
  %v85 = vld [vmem:[%s1 + $0x198] sm:$0xff]
  %v86 = vld [vmem:[%s1 + $0x1a0] sm:$0xff]
  %v87 = vld [vmem:[%s1 + $0x1a8] sm:$0xff]
  %v88 = vld [vmem:[%s1 + $0x1b0] sm:$0xff]
  %v89 = vld [vmem:[%s1 + $0x1b8] sm:$0xff]
  %v90 = vld [vmem:[%s1 + $0x1c0] sm:$0xff]
  %v91 = vld [vmem:[%s1 + $0x1c8] sm:$0xff]
  %v92 = vld [vmem:[%s1 + $0x1d0] sm:$0xff]
  %v93 = vld [vmem:[%s1 + $0x1d8] sm:$0xff]
  %v94 = vld [vmem:[%s1 + $0x1e0] sm:$0xff]
  %v95 = vld [vmem:[%s1 + $0x1e8] sm:$0xff]
  %v96 = vld [vmem:[%s1 + $0x1f0] sm:$0xff]
  %v97 = vld [vmem:[%s1 + $0x1f8] sm:$0xff]
  %v98 = vld [vmem:[%s1 + $0x200] sm:$0xff]
  %v99 = vld [vmem:[%s1 + $0x208] sm:$0xff]
  %v100 = vld [vmem:[%s1 + $0x210] sm:$0xff]
  %v101 = vld [vmem:[%s1 + $0x218] sm:$0xff]
  %v102 = vld [vmem:[%s1 + $0x220] sm:$0xff]
  %v103 = vld [vmem:[%s1 + $0x228] sm:$0xff]
  %v104 = vld [vmem:[%s1 + $0x230] sm:$0xff]
  %v105 = vld [vmem:[%s1 + $0x238] sm:$0xff]
  %v106 = vld [vmem:[%s1 + $0x240] sm:$0xff]
  %v107 = vld [vmem:[%s1 + $0x248] sm:$0xff]
  %v108 = vld [vmem:[%s1 + $0x250] sm:$0xff]
  %v109 = vld [vmem:[%s1 + $0x258] sm:$0xff]
  %v110 = vld [vmem:[%s1 + $0x260] sm:$0xff]
  %v111 = vld [vmem:[%s1 + $0x268] sm:$0xff]
  %v112 = vld [vmem:[%s1 + $0x270] sm:$0xff]
  %v113 = vld [vmem:[%s1 + $0x278] sm:$0xff]
  %v114 = vld [vmem:[%s1 + $0x280] sm:$0xff]
  %v115 = vld [vmem:[%s1 + $0x288] sm:$0xff]
  %v116 = vld [vmem:[%s1 + $0x290] sm:$0xff]
  %v117 = vld [vmem:[%s1 + $0x298] sm:$0xff]
  %v118 = vld [vmem:[%s1 + $0x2a0] sm:$0xff]
  %v119 = vld [vmem:[%s1 + $0x2a8] sm:$0xff]
  %v120 = vld [vmem:[%s1 + $0x2b0] sm:$0xff]
  %v121 = vld [vmem:[%s1 + $0x2b8] sm:$0xff]
  %v122 = vld [vmem:[%s1 + $0x2c0] sm:$0xff]
  %v123 = vld [vmem:[%s1 + $0x2c8] sm:$0xff]
  %v124 = vld [vmem:[%s1 + $0x2d0] sm:$0xff]
  %v125 = vld [vmem:[%s1 + $0x2d8] sm:$0xff]
  %v126 = vld [vmem:[%s1 + $0x2e0] sm:$0xff]
  %v127 = vld [vmem:[%s1 + $0x2e8] sm:$0xff]
  %v128 = vld [vmem:[%s1 + $0x2f0] sm:$0xff]
  %v129 = vld [vmem:[%s1 + $0x2f8] sm:$0xff]
  %v130 = vld [vmem:[%s1 + $0x300] sm:$0xff]
  %v131 = vld [vmem:[%s1 + $0x308] sm:$0xff]
  %v132 = vld [vmem:[%s1 + $0x310] sm:$0xff]
  %v133 = vld [vmem:[%s1 + $0x318] sm:$0xff]
  %v134 = vld [vmem:[%s1 + $0x320] sm:$0xff]
  %v135 = vld [vmem:[%s1 + $0x328] sm:$0xff]
  %v136 = vld [vmem:[%s1 + $0x330] sm:$0xff]
  %v137 = vld [vmem:[%s1 + $0x338] sm:$0xff]
  %v138 = vld [vmem:[%s1 + $0x340] sm:$0xff]
  %v139 = vld [vmem:[%s1 + $0x348] sm:$0xff]
  %v140 = vld [vmem:[%s1 + $0x350] sm:$0xff]
  %v141 = vld [vmem:[%s1 + $0x358] sm:$0xff]
  %v142 = vld [vmem:[%s1 + $0x360] sm:$0xff]
  %v143 = vld [vmem:[%s1 + $0x368] sm:$0xff]
  %v144 = vld [vmem:[%s1 + $0x370] sm:$0xff]
  %v145 = vld [vmem:[%s1 + $0x378] sm:$0xff]
  %v146 = vld [vmem:[%s1 + $0x380] sm:$0xff]
  %v147 = vld [vmem:[%s1 + $0x388] sm:$0xff]
  %v148 = vld [vmem:[%s1 + $0x390] sm:$0xff]
  %v149 = vld [vmem:[%s1 + $0x398] sm:$0xff]
  %v150 = vld [vmem:[%s1 + $0x3a0] sm:$0xff]
  %v151 = vld [vmem:[%s1 + $0x3a8] sm:$0xff]
  %v152 = vld [vmem:[%s1 + $0x3b0] sm:$0xff]
  %v153 = vld [vmem:[%s1 + $0x3b8] sm:$0xff]
  %v154 = vld [vmem:[%s1 + $0x3c0] sm:$0xff]
  %v155 = vld [vmem:[%s1 + $0x3c8] sm:$0xff]
  %v156 = vld [vmem:[%s1 + $0x3d0] sm:$0xff]
  %v157 = vld [vmem:[%s1 + $0x3d8] sm:$0xff]
  %v158 = vld [vmem:[%s1 + $0x3e0] sm:$0xff]
  %v159 = vld [vmem:[%s1 + $0x3e8] sm:$0xff]
  %v160 = vld [vmem:[%s1 + $0x3f0] sm:$0xff]
  %v161 = vld [vmem:[%s1 + $0x3f8] sm:$0xff]
  %v162 = vld [vmem:[%s2] sm:$0x1]
  %v164 = vlaneseq
  %v165 = vshrl.u32 %v164, 7
  %v166 = vsub.s32 0, %v165
  %v167 = vrot.slane %v162, %v166
  %169 = vmatprep.subr.mxu0 0.0
  %170 = vmatpush1.msra.mxu0 %v34
  %171 = vmatprep.subr.mxu0 0.0
  %172 = vmatpush1.msra.mxu0 %v35
  %173 = vmatprep.subr.mxu0 0.0
  %174 = vmatpush1.msra.mxu0 %v36
  %175 = vmatprep.subr.mxu0 0.0
  %176 = vmatpush1.msra.mxu0 %v37
  %177 = vmatprep.subr.mxu0 0.0
  %178 = vmatpush1.msra.mxu0 %v38
  %179 = vmatprep.subr.mxu0 0.0
  %180 = vmatpush1.msra.mxu0 %v39
  %181 = vmatprep.subr.mxu0 0.0
  %182 = vmatpush1.msra.mxu0 %v40
  %183 = vmatprep.subr.mxu0 0.0
  %184 = vmatpush1.msra.mxu0 %v41
  %185 = vmatprep.subr.mxu0 0.0
  %186 = vmatpush1.msra.mxu0 %v42
  %187 = vmatprep.subr.mxu0 0.0
  %188 = vmatpush1.msra.mxu0 %v43
  %189 = vmatprep.subr.mxu0 0.0
  %190 = vmatpush1.msra.mxu0 %v44
  %191 = vmatprep.subr.mxu0 0.0
  %192 = vmatpush1.msra.mxu0 %v45
  %193 = vmatprep.subr.mxu0 0.0
  %194 = vmatpush1.msra.mxu0 %v46
  %195 = vmatprep.subr.mxu0 0.0
  %196 = vmatpush1.msra.mxu0 %v47
  %197 = vmatprep.subr.mxu0 0.0
  %198 = vmatpush1.msra.mxu0 %v48
  %199 = vmatprep.subr.mxu0 0.0
  %200 = vmatpush1.msra.mxu0 %v49
  %201 = vmatprep.subr.mxu0 0.0
  %202 = vmatpush1.msra.mxu0 %v50
  %203 = vmatprep.subr.mxu0 0.0
  %204 = vmatpush1.msra.mxu0 %v51
  %205 = vmatprep.subr.mxu0 0.0
  %206 = vmatpush1.msra.mxu0 %v52
  %207 = vmatprep.subr.mxu0 0.0
  %208 = vmatpush1.msra.mxu0 %v53
  %209 = vmatprep.subr.mxu0 0.0
  %210 = vmatpush1.msra.mxu0 %v54
  %211 = vmatprep.subr.mxu0 0.0
  %212 = vmatpush1.msra.mxu0 %v55
  %213 = vmatprep.subr.mxu0 0.0
  %214 = vmatpush1.msra.mxu0 %v56
  %215 = vmatprep.subr.mxu0 0.0
  %216 = vmatpush1.msra.mxu0 %v57
  %217 = vmatprep.subr.mxu0 0.0
  %218 = vmatpush1.msra.mxu0 %v58
  %219 = vmatprep.subr.mxu0 0.0
  %220 = vmatpush1.msra.mxu0 %v59
  %221 = vmatprep.subr.mxu0 0.0
  %222 = vmatpush1.msra.mxu0 %v60
  %223 = vmatprep.subr.mxu0 0.0
  %224 = vmatpush1.msra.mxu0 %v61
  %225 = vmatprep.subr.mxu0 0.0
  %226 = vmatpush1.msra.mxu0 %v62
  %227 = vmatprep.subr.mxu0 0.0
  %228 = vmatpush1.msra.mxu0 %v63
  %229 = vmatprep.subr.mxu0 0.0
  %230 = vmatpush1.msra.mxu0 %v64
  %231 = vmatprep.subr.mxu0 0.0
  %232 = vmatpush1.msra.mxu0 %v65
  %233 = vmatprep.mubr.f32.mxu0 %v27
  %234 = vmatmul.mubr.f32.gmra.mrb[0].mxu0 %v26
  %v235 = vpop.f32.mrb[0].mxu0
  %v236 = vadd.f32 %v167, %v235
  %v237 = vpop.f32.mrb[0].mxu0
  %238 = vdwg.mxu0
  %239 = vmatprep.subr.mxu0 0.0
  %240 = vmatpush1.msra.mxu0 %v66
  %241 = vmatprep.subr.mxu0 0.0
  %242 = vmatpush1.msra.mxu0 %v67
  %243 = vmatprep.subr.mxu0 0.0
  %244 = vmatpush1.msra.mxu0 %v68
  %245 = vmatprep.subr.mxu0 0.0
  %246 = vmatpush1.msra.mxu0 %v69
  %247 = vmatprep.subr.mxu0 0.0
  %248 = vmatpush1.msra.mxu0 %v70
  %249 = vmatprep.subr.mxu0 0.0
  %250 = vmatpush1.msra.mxu0 %v71
  %251 = vmatprep.subr.mxu0 0.0
  %252 = vmatpush1.msra.mxu0 %v72
  %253 = vmatprep.subr.mxu0 0.0
  %254 = vmatpush1.msra.mxu0 %v73
  %255 = vmatprep.subr.mxu0 0.0
  %256 = vmatpush1.msra.mxu0 %v74
  %257 = vmatprep.subr.mxu0 0.0
  %258 = vmatpush1.msra.mxu0 %v75
  %259 = vmatprep.subr.mxu0 0.0
  %260 = vmatpush1.msra.mxu0 %v76
  %261 = vmatprep.subr.mxu0 0.0
  %262 = vmatpush1.msra.mxu0 %v77
  %263 = vmatprep.subr.mxu0 0.0
  %264 = vmatpush1.msra.mxu0 %v78
  %265 = vmatprep.subr.mxu0 0.0
  %266 = vmatpush1.msra.mxu0 %v79
  %267 = vmatprep.subr.mxu0 0.0
  %268 = vmatpush1.msra.mxu0 %v80
  %269 = vmatprep.subr.mxu0 0.0
  %270 = vmatpush1.msra.mxu0 %v81
  %271 = vmatprep.subr.mxu0 0.0
  %272 = vmatpush1.msra.mxu0 %v82
  %273 = vmatprep.subr.mxu0 0.0
  %274 = vmatpush1.msra.mxu0 %v83
  %275 = vmatprep.subr.mxu0 0.0
  %276 = vmatpush1.msra.mxu0 %v84
  %277 = vmatprep.subr.mxu0 0.0
  %278 = vmatpush1.msra.mxu0 %v85
  %279 = vmatprep.subr.mxu0 0.0
  %280 = vmatpush1.msra.mxu0 %v86
  %281 = vmatprep.subr.mxu0 0.0
  %282 = vmatpush1.msra.mxu0 %v87
  %283 = vmatprep.subr.mxu0 0.0
  %284 = vmatpush1.msra.mxu0 %v88
  %285 = vmatprep.subr.mxu0 0.0
  %286 = vmatpush1.msra.mxu0 %v89
  %287 = vmatprep.subr.mxu0 0.0
  %288 = vmatpush1.msra.mxu0 %v90
  %289 = vmatprep.subr.mxu0 0.0
  %290 = vmatpush1.msra.mxu0 %v91
  %291 = vmatprep.subr.mxu0 0.0
  %292 = vmatpush1.msra.mxu0 %v92
  %293 = vmatprep.subr.mxu0 0.0
  %294 = vmatpush1.msra.mxu0 %v93
  %295 = vmatprep.subr.mxu0 0.0
  %296 = vmatpush1.msra.mxu0 %v94
  %297 = vmatprep.subr.mxu0 0.0
  %298 = vmatpush1.msra.mxu0 %v95
  %299 = vmatprep.subr.mxu0 0.0
  %300 = vmatpush1.msra.mxu0 %v96
  %301 = vmatprep.subr.mxu0 0.0
  %302 = vmatpush1.msra.mxu0 %v97
  %303 = vmatprep.mubr.f32.mxu0 %v29
  %304 = vmatmul.mubr.f32.gmra.mrb[0].mxu0 %v28
  %v305 = vpop.f32.mrb[0].mxu0
  %v306 = vadd.f32 %v236, %v305
  %v307 = vpop.f32.mrb[0].mxu0
  %308 = vdwg.mxu0
  %309 = vmatprep.subr.mxu0 0.0
  %310 = vmatpush1.msra.mxu0 %v98
  %311 = vmatprep.subr.mxu0 0.0
  %312 = vmatpush1.msra.mxu0 %v99
  %313 = vmatprep.subr.mxu0 0.0
  %314 = vmatpush1.msra.mxu0 %v100
  %315 = vmatprep.subr.mxu0 0.0
  %316 = vmatpush1.msra.mxu0 %v101
  %317 = vmatprep.subr.mxu0 0.0
  %318 = vmatpush1.msra.mxu0 %v102
  %319 = vmatprep.subr.mxu0 0.0
  %320 = vmatpush1.msra.mxu0 %v103
  %321 = vmatprep.subr.mxu0 0.0
  %322 = vmatpush1.msra.mxu0 %v104
  %323 = vmatprep.subr.mxu0 0.0
  %324 = vmatpush1.msra.mxu0 %v105
  %325 = vmatprep.subr.mxu0 0.0
  %326 = vmatpush1.msra.mxu0 %v106
  %327 = vmatprep.subr.mxu0 0.0
  %328 = vmatpush1.msra.mxu0 %v107
  %329 = vmatprep.subr.mxu0 0.0
  %330 = vmatpush1.msra.mxu0 %v108
  %331 = vmatprep.subr.mxu0 0.0
  %332 = vmatpush1.msra.mxu0 %v109
  %333 = vmatprep.subr.mxu0 0.0
  %334 = vmatpush1.msra.mxu0 %v110
  %335 = vmatprep.subr.mxu0 0.0
  %336 = vmatpush1.msra.mxu0 %v111
  %337 = vmatprep.subr.mxu0 0.0
  %338 = vmatpush1.msra.mxu0 %v112
  %339 = vmatprep.subr.mxu0 0.0
  %340 = vmatpush1.msra.mxu0 %v113
  %341 = vmatprep.subr.mxu0 0.0
  %342 = vmatpush1.msra.mxu0 %v114
  %343 = vmatprep.subr.mxu0 0.0
  %344 = vmatpush1.msra.mxu0 %v115
  %345 = vmatprep.subr.mxu0 0.0
  %346 = vmatpush1.msra.mxu0 %v116
  %347 = vmatprep.subr.mxu0 0.0
  %348 = vmatpush1.msra.mxu0 %v117
  %349 = vmatprep.subr.mxu0 0.0
  %350 = vmatpush1.msra.mxu0 %v118
  %351 = vmatprep.subr.mxu0 0.0
  %352 = vmatpush1.msra.mxu0 %v119
  %353 = vmatprep.subr.mxu0 0.0
  %354 = vmatpush1.msra.mxu0 %v120
  %355 = vmatprep.subr.mxu0 0.0
  %356 = vmatpush1.msra.mxu0 %v121
  %357 = vmatprep.subr.mxu0 0.0
  %358 = vmatpush1.msra.mxu0 %v122
  %359 = vmatprep.subr.mxu0 0.0
  %360 = vmatpush1.msra.mxu0 %v123
  %361 = vmatprep.subr.mxu0 0.0
  %362 = vmatpush1.msra.mxu0 %v124
  %363 = vmatprep.subr.mxu0 0.0
  %364 = vmatpush1.msra.mxu0 %v125
  %365 = vmatprep.subr.mxu0 0.0
  %366 = vmatpush1.msra.mxu0 %v126
  %367 = vmatprep.subr.mxu0 0.0
  %368 = vmatpush1.msra.mxu0 %v127
  %369 = vmatprep.subr.mxu0 0.0
  %370 = vmatpush1.msra.mxu0 %v128
  %371 = vmatprep.subr.mxu0 0.0
  %372 = vmatpush1.msra.mxu0 %v129
  %373 = vmatprep.mubr.f32.mxu0 %v31
  %374 = vmatmul.mubr.f32.gmra.mrb[0].mxu0 %v30
  %v375 = vpop.f32.mrb[0].mxu0
  %v376 = vadd.f32 %v306, %v375
  %v377 = vpop.f32.mrb[0].mxu0
  %378 = vdwg.mxu0
  %379 = vmatprep.subr.mxu0 0.0
  %380 = vmatpush1.msra.mxu0 %v130
  %381 = vmatprep.subr.mxu0 0.0
  %382 = vmatpush1.msra.mxu0 %v131
  %383 = vmatprep.subr.mxu0 0.0
  %384 = vmatpush1.msra.mxu0 %v132
  %385 = vmatprep.subr.mxu0 0.0
  %386 = vmatpush1.msra.mxu0 %v133
  %387 = vmatprep.subr.mxu0 0.0
  %388 = vmatpush1.msra.mxu0 %v134
  %389 = vmatprep.subr.mxu0 0.0
  %390 = vmatpush1.msra.mxu0 %v135
  %391 = vmatprep.subr.mxu0 0.0
  %392 = vmatpush1.msra.mxu0 %v136
  %393 = vmatprep.subr.mxu0 0.0
  %394 = vmatpush1.msra.mxu0 %v137
  %395 = vmatprep.subr.mxu0 0.0
  %396 = vmatpush1.msra.mxu0 %v138
  %397 = vmatprep.subr.mxu0 0.0
  %398 = vmatpush1.msra.mxu0 %v139
  %399 = vmatprep.subr.mxu0 0.0
  %400 = vmatpush1.msra.mxu0 %v140
  %401 = vmatprep.subr.mxu0 0.0
  %402 = vmatpush1.msra.mxu0 %v141
  %403 = vmatprep.subr.mxu0 0.0
  %404 = vmatpush1.msra.mxu0 %v142
  %405 = vmatprep.subr.mxu0 0.0
  %406 = vmatpush1.msra.mxu0 %v143
  %407 = vmatprep.subr.mxu0 0.0
  %408 = vmatpush1.msra.mxu0 %v144
  %409 = vmatprep.subr.mxu0 0.0
  %410 = vmatpush1.msra.mxu0 %v145
  %411 = vmatprep.subr.mxu0 0.0
  %412 = vmatpush1.msra.mxu0 %v146
  %413 = vmatprep.subr.mxu0 0.0
  %414 = vmatpush1.msra.mxu0 %v147
  %415 = vmatprep.subr.mxu0 0.0
  %416 = vmatpush1.msra.mxu0 %v148
  %417 = vmatprep.subr.mxu0 0.0
  %418 = vmatpush1.msra.mxu0 %v149
  %419 = vmatprep.subr.mxu0 0.0
  %420 = vmatpush1.msra.mxu0 %v150
  %421 = vmatprep.subr.mxu0 0.0
  %422 = vmatpush1.msra.mxu0 %v151
  %423 = vmatprep.subr.mxu0 0.0
  %424 = vmatpush1.msra.mxu0 %v152
  %425 = vmatprep.subr.mxu0 0.0
  %426 = vmatpush1.msra.mxu0 %v153
  %427 = vmatprep.subr.mxu0 0.0
  %428 = vmatpush1.msra.mxu0 %v154
  %429 = vmatprep.subr.mxu0 0.0
  %430 = vmatpush1.msra.mxu0 %v155
  %431 = vmatprep.subr.mxu0 0.0
  %432 = vmatpush1.msra.mxu0 %v156
  %433 = vmatprep.subr.mxu0 0.0
  %434 = vmatpush1.msra.mxu0 %v157
  %435 = vmatprep.subr.mxu0 0.0
  %436 = vmatpush1.msra.mxu0 %v158
  %437 = vmatprep.subr.mxu0 0.0
  %438 = vmatpush1.msra.mxu0 %v159
  %439 = vmatprep.subr.mxu0 0.0
  %440 = vmatpush1.msra.mxu0 %v160
  %441 = vmatprep.subr.mxu0 0.0
  %442 = vmatpush1.msra.mxu0 %v161
  %443 = vmatprep.mubr.f32.mxu0 %v33
  %444 = vmatmul.mubr.f32.gmra.mrb[0].mxu0 %v32
  %v445 = vpop.f32.mrb[0].mxu0
  %v446 = vadd.f32 %v376, %v445
  %v447 = vpop.f32.mrb[0].mxu0
  %448 = vdwg.mxu0
  %v449 = vmax.f32 %v446, 0.0
  %v450 = vld [vmem:[%s3] sm:$0xff]
  %v451 = vld [vmem:[%s3 + $0x8] sm:$0xff]
  %v452 = vld [vmem:[%s3 + $0x10] sm:$0xff]
  %v453 = vld [vmem:[%s3 + $0x18] sm:$0xff]
  %v454 = vld [vmem:[%s4] sm:$0x1]
  %v456 = vlaneseq
  %v457 = vshrl.u32 %v456, 7
  %v458 = vsub.s32 0, %v457
  %v459 = vrot.slane %v454, %v458
  %vm461 = vcmask 261120
  %v463 = vsel %vm461, %v449, 0
  %465 = vmatprep.subr.mxu0 0.0
  %466 = vmatpush1.msra.mxu0 %v450
  %467 = vmatprep.subr.mxu0 0.0
  %468 = vmatpush1.msra.mxu0 %v451
  %469 = vmatprep.subr.mxu0 0.0
  %470 = vmatpush1.msra.mxu0 %v452
  %471 = vmatprep.subr.mxu0 0.0
  %472 = vmatpush1.msra.mxu0 %v453
  %473 = vmatprep.subr.mxu0 0.0
  %474 = vmatpush1.msra.mxu0 0.0
  %475 = vmatprep.subr.mxu0 0.0
  %476 = vmatpush1.msra.mxu0 0.0
  %477 = vmatprep.subr.mxu0 0.0
  %478 = vmatpush1.msra.mxu0 0.0
  %479 = vmatprep.subr.mxu0 0.0
  %480 = vmatpush1.msra.mxu0 0.0
  %481 = vmatprep.subr.mxu0 0.0
  %482 = vmatpush1.msra.mxu0 0.0
  %483 = vmatprep.subr.mxu0 0.0
  %484 = vmatpush1.msra.mxu0 0.0
  %485 = vmatprep.subr.mxu0 0.0
  %486 = vmatpush1.msra.mxu0 0.0
  %487 = vmatprep.subr.mxu0 0.0
  %488 = vmatpush1.msra.mxu0 0.0
  %489 = vmatprep.subr.mxu0 0.0
  %490 = vmatpush1.msra.mxu0 0.0
  %491 = vmatprep.subr.mxu0 0.0
  %492 = vmatpush1.msra.mxu0 0.0
  %493 = vmatprep.subr.mxu0 0.0
  %494 = vmatpush1.msra.mxu0 0.0
  %495 = vmatprep.subr.mxu0 0.0
  %496 = vmatpush1.msra.mxu0 0.0
  %497 = vmatprep.subr.mxu0 0.0
  %498 = vmatpush1.msra.mxu0 0.0
  %499 = vmatprep.subr.mxu0 0.0
  %500 = vmatpush1.msra.mxu0 0.0
  %501 = vmatprep.subr.mxu0 0.0
  %502 = vmatpush1.msra.mxu0 0.0
  %503 = vmatprep.subr.mxu0 0.0
  %504 = vmatpush1.msra.mxu0 0.0
  %505 = vmatprep.subr.mxu0 0.0
  %506 = vmatpush1.msra.mxu0 0.0
  %507 = vmatprep.subr.mxu0 0.0
  %508 = vmatpush1.msra.mxu0 0.0
  %509 = vmatprep.subr.mxu0 0.0
  %510 = vmatpush1.msra.mxu0 0.0
  %511 = vmatprep.subr.mxu0 0.0
  %512 = vmatpush1.msra.mxu0 0.0
  %513 = vmatprep.subr.mxu0 0.0
  %514 = vmatpush1.msra.mxu0 0.0
  %515 = vmatprep.subr.mxu0 0.0
  %516 = vmatpush1.msra.mxu0 0.0
  %517 = vmatprep.subr.mxu0 0.0
  %518 = vmatpush1.msra.mxu0 0.0
  %519 = vmatprep.subr.mxu0 0.0
  %520 = vmatpush1.msra.mxu0 0.0
  %521 = vmatprep.subr.mxu0 0.0
  %522 = vmatpush1.msra.mxu0 0.0
  %523 = vmatprep.subr.mxu0 0.0
  %524 = vmatpush1.msra.mxu0 0.0
  %525 = vmatprep.subr.mxu0 0.0
  %526 = vmatpush1.msra.mxu0 0.0
  %527 = vmatprep.subr.mxu0 0.0
  %528 = vmatpush1.msra.mxu0 0.0
  %529 = vmatprep.mubr.f32.mxu0 0.0
  %530 = vmatmul.mubr.f32.gmra.mrb[0].mxu0 %v463
  %v531 = vpop.f32.mrb[0].mxu0
  %v532 = vadd.f32 %v459, %v531
  %v533 = vpop.f32.mrb[0].mxu0
  %534 = vdwg.mxu0
  %v535 = vmax.f32 %v532, 0.0
  %v536 = vld [vmem:[%s5] sm:$0xff]
  %v537 = vld [vmem:[%s5 + $0x8] sm:$0xff]
  %v538 = vld [vmem:[%s5 + $0x10] sm:$0xff]
  %v539 = vld [vmem:[%s5 + $0x18] sm:$0xff]
  %v540 = vld [vmem:[%s6] sm:$0x1]
  %v542 = vlaneseq
  %v543 = vshrl.u32 %v542, 7
  %v544 = vsub.s32 0, %v543
  %v545 = vrot.slane %v540, %v544
  %v548 = vsel %vm461, %v535, 0
  %550 = vmatprep.subr.mxu0 0.0
  %551 = vmatpush1.msra.mxu0 %v536
  %552 = vmatprep.subr.mxu0 0.0
  %553 = vmatpush1.msra.mxu0 %v537
  %554 = vmatprep.subr.mxu0 0.0
  %555 = vmatpush1.msra.mxu0 %v538
  %556 = vmatprep.subr.mxu0 0.0
  %557 = vmatpush1.msra.mxu0 %v539
  %558 = vmatprep.subr.mxu0 0.0
  %559 = vmatpush1.msra.mxu0 0.0
  %560 = vmatprep.subr.mxu0 0.0
  %561 = vmatpush1.msra.mxu0 0.0
  %562 = vmatprep.subr.mxu0 0.0
  %563 = vmatpush1.msra.mxu0 0.0
  %564 = vmatprep.subr.mxu0 0.0
  %565 = vmatpush1.msra.mxu0 0.0
  %566 = vmatprep.subr.mxu0 0.0
  %567 = vmatpush1.msra.mxu0 0.0
  %568 = vmatprep.subr.mxu0 0.0
  %569 = vmatpush1.msra.mxu0 0.0
  %570 = vmatprep.subr.mxu0 0.0
  %571 = vmatpush1.msra.mxu0 0.0
  %572 = vmatprep.subr.mxu0 0.0
  %573 = vmatpush1.msra.mxu0 0.0
  %574 = vmatprep.subr.mxu0 0.0
  %575 = vmatpush1.msra.mxu0 0.0
  %576 = vmatprep.subr.mxu0 0.0
  %577 = vmatpush1.msra.mxu0 0.0
  %578 = vmatprep.subr.mxu0 0.0
  %579 = vmatpush1.msra.mxu0 0.0
  %580 = vmatprep.subr.mxu0 0.0
  %581 = vmatpush1.msra.mxu0 0.0
  %582 = vmatprep.subr.mxu0 0.0
  %583 = vmatpush1.msra.mxu0 0.0
  %584 = vmatprep.subr.mxu0 0.0
  %585 = vmatpush1.msra.mxu0 0.0
  %586 = vmatprep.subr.mxu0 0.0
  %587 = vmatpush1.msra.mxu0 0.0
  %588 = vmatprep.subr.mxu0 0.0
  %589 = vmatpush1.msra.mxu0 0.0
  %590 = vmatprep.subr.mxu0 0.0
  %591 = vmatpush1.msra.mxu0 0.0
  %592 = vmatprep.subr.mxu0 0.0
  %593 = vmatpush1.msra.mxu0 0.0
  %594 = vmatprep.subr.mxu0 0.0
  %595 = vmatpush1.msra.mxu0 0.0
  %596 = vmatprep.subr.mxu0 0.0
  %597 = vmatpush1.msra.mxu0 0.0
  %598 = vmatprep.subr.mxu0 0.0
  %599 = vmatpush1.msra.mxu0 0.0
  %600 = vmatprep.subr.mxu0 0.0
  %601 = vmatpush1.msra.mxu0 0.0
  %602 = vmatprep.subr.mxu0 0.0
  %603 = vmatpush1.msra.mxu0 0.0
  %604 = vmatprep.subr.mxu0 0.0
  %605 = vmatpush1.msra.mxu0 0.0
  %606 = vmatprep.subr.mxu0 0.0
  %607 = vmatpush1.msra.mxu0 0.0
  %608 = vmatprep.subr.mxu0 0.0
  %609 = vmatpush1.msra.mxu0 0.0
  %610 = vmatprep.subr.mxu0 0.0
  %611 = vmatpush1.msra.mxu0 0.0
  %612 = vmatprep.subr.mxu0 0.0
  %613 = vmatpush1.msra.mxu0 0.0
  %614 = vmatprep.mubr.f32.mxu0 0.0
  %615 = vmatmul.mubr.f32.gmra.mrb[0].mxu0 %v548
  %v616 = vpop.f32.mrb[0].mxu0
  %v617 = vadd.f32 %v545, %v616
  %v618 = vpop.f32.mrb[0].mxu0
  %619 = vdwg.mxu0
  %620 = vst [vmem:[%s7] sm:$0xff] %v617
  // Predicated region
  $region30: #{flexible_nn_forward.1} parent=0 // pred_check
    _
  $region31: #{flexible_nn_forward.1} parent=0 // pred_check_branch
    %622 = sbr.rel (0) target = $region33
  $region32: #{flexible_nn_forward.1} parent=0 // pred_region
    _
  $region33: #{flexible_nn_forward.1} parent=0 // pred_fallthru
    _
  // Predicated region
  $region34: #{flexible_nn_forward.1} parent=0 // pred_check
    _
  $region35: #{flexible_nn_forward.1} parent=0 // pred_check_branch
    %624 = sbr.rel (0) target = $region37
  $region36: #{flexible_nn_forward.1} parent=0 // pred_region
    _
  $region37: #{flexible_nn_forward.1} parent=0 // pred_fallthru
    _

</llo_original>
